<compile_context>
chip_gen: v7x
topology: tpu7x:2x2x1
jax: 0.10.0
libtpu: 0.0.40
codegen_flags: <defaults>
</compile_context>

<pallas_src>
import functools

import jax
import jax.numpy as jnp
from jax.experimental import pallas as pl
from jax.experimental.pallas import tpu as pltpu


def _round_up(x, m):
    return (x + m - 1) // m * m


# ------------------------------ Pallas kernel -------------------------------

def _contrastive_loss_kernel(o1_ref, o2_ref, label_ref, mask_ref, loss_ref, *,
                             margin, eps, inv_n):
    # o1/o2/mask: (Bp, Dp); label: (Bp, 1); loss: (1, 128) scalar broadcast.
    diff = o1_ref[...] - o2_ref[...] + eps             # eps matches F.pairwise_distance
    sq = diff * diff * mask_ref[...]                   # zero padded rows / feature cols
    dist2 = jnp.sum(sq, axis=-1, keepdims=True)        # (Bp, 1) squared distance
    dist = jnp.sqrt(dist2)                             # (Bp, 1) euclidean distance
    lab = label_ref[...]                               # (Bp, 1); 0 on padded rows
    hinge = jnp.maximum(margin - dist, 0.0)
    per_row = (1.0 - lab) * dist2 + lab * hinge * hinge  # padded rows contribute 0
    total = jnp.sum(per_row, axis=0, keepdims=True) * inv_n   # (1, 1) = mean over B
    loss_ref[...] = jnp.broadcast_to(total, loss_ref.shape)   # lane-dense store


# --------------------------------- wrapper -----------------------------------

def contrastive_loss(output1, output2, label, *, margin=2.0, eps=1e-6):
    """Pallas TPU implementation of ContrastiveLoss.forward -> scalar loss."""
    output1 = jnp.asarray(output1, jnp.float32)
    output2 = jnp.asarray(output2, jnp.float32)
    B, D = output1.shape
    label = jnp.asarray(label, jnp.float32).reshape(B, 1)

    Bp = _round_up(B, 8)
    Dp = _round_up(D, 128)

    o1p = jnp.zeros((Bp, Dp), jnp.float32).at[:B, :D].set(output1)
    o2p = jnp.zeros((Bp, Dp), jnp.float32).at[:B, :D].set(output2)
    labp = jnp.zeros((Bp, 1), jnp.float32).at[:B, :].set(label)
    mask = jnp.zeros((Bp, Dp), jnp.float32).at[:B, :D].set(1.0)

    out = pl.pallas_call(
        functools.partial(_contrastive_loss_kernel,
                          margin=float(margin), eps=float(eps), inv_n=1.0 / B),
        out_shape=jax.ShapeDtypeStruct((1, 128), jnp.float32),
        in_specs=[pl.BlockSpec(memory_space=pltpu.MemorySpace.VMEM)] * 4,
        out_specs=pl.BlockSpec(memory_space=pltpu.MemorySpace.VMEM),
    )(o1p, o2p, labp, mask)
    return out[0, 0]


# --------------------------------- reference ---------------------------------

def _reference_loss(output1, output2, label, *, margin=2.0, eps=1e-6):
    d = jnp.sqrt(jnp.sum((output1 - output2 + eps) ** 2, axis=-1, keepdims=True))
    return jnp.mean((1.0 - label) * d * d
                    + label * jnp.maximum(margin - d, 0.0) ** 2)


if __name__ == "__main__":
    key = jax.random.PRNGKey(0)
    k1, k2, k3 = jax.random.split(key, 3)
    B, D = 8, 32                       # small embedding batch / feature dim
    output1 = jax.random.normal(k1, (B, D), jnp.float32)
    output2 = jax.random.normal(k2, (B, D), jnp.float32)
    label = jax.random.bernoulli(k3, 0.5, (B, 1)).astype(jnp.float32)

    loss_fn = jax.jit(functools.partial(contrastive_loss, margin=2.0))
    loss = loss_fn(output1, output2, label)
    jax.block_until_ready(loss)

    ref = _reference_loss(output1, output2, label, margin=2.0)
    assert loss.shape == ()
    err = abs(float(loss) - float(ref))
    assert err <= 1e-4 * max(1.0, abs(float(ref))), (float(loss), float(ref))
    print("KERNEL_OK")
</pallas_src>

<mosaic_0001>
module attributes {stable_mosaic.version = 11 : i64} {
  func.func @_contrastive_loss_kernel(%arg0: memref<8x128xf32, #tpu.memory_space<vmem>>, %arg1: memref<8x128xf32, #tpu.memory_space<vmem>>, %arg2: memref<8x1xf32, #tpu.memory_space<vmem>>, %arg3: memref<8x128xf32, #tpu.memory_space<vmem>>, %arg4: memref<1x128xf32, #tpu.memory_space<vmem>>) attributes {dimension_semantics = [], scalar_prefetch = 0 : i64, scratch_operands = 0 : i64, tpu.core_type = #tpu.core_type<tc>} {
    %c0 = arith.constant 0 : index
    %c0_0 = arith.constant 0 : index
    %0 = vector.load %arg0[%c0, %c0_0] : memref<8x128xf32, #tpu.memory_space<vmem>>, vector<8x128xf32>
    %c0_1 = arith.constant 0 : index
    %c0_2 = arith.constant 0 : index
    %1 = vector.load %arg1[%c0_1, %c0_2] : memref<8x128xf32, #tpu.memory_space<vmem>>, vector<8x128xf32>
    %2 = arith.subf %0, %1 : vector<8x128xf32>
    %cst = arith.constant 9.99999997E-7 : f32
    %3 = vector.broadcast %cst : f32 to vector<8x128xf32>
    %4 = arith.addf %2, %3 : vector<8x128xf32>
    %5 = arith.mulf %4, %4 : vector<8x128xf32>
    %c0_3 = arith.constant 0 : index
    %c0_4 = arith.constant 0 : index
    %6 = vector.load %arg3[%c0_3, %c0_4] : memref<8x128xf32, #tpu.memory_space<vmem>>, vector<8x128xf32>
    %7 = arith.mulf %5, %6 : vector<8x128xf32>
    %cst_5 = arith.constant dense<0.000000e+00> : vector<8xf32>
    %8 = vector.multi_reduction <add>, %7, %cst_5 [1] : vector<8x128xf32> to vector<8xf32>
    %9 = vector.shape_cast %8 : vector<8xf32> to vector<8x1xf32>
    %10 = math.sqrt %9 : vector<8x1xf32>
    %c0_6 = arith.constant 0 : index
    %c0_7 = arith.constant 0 : index
    %11 = vector.load %arg2[%c0_6, %c0_7] : memref<8x1xf32, #tpu.memory_space<vmem>>, vector<8x1xf32>
    %cst_8 = arith.constant 2.000000e+00 : f32
    %12 = vector.broadcast %cst_8 : f32 to vector<8x1xf32>
    %13 = arith.subf %12, %10 : vector<8x1xf32>
    %cst_9 = arith.constant 0.000000e+00 : f32
    %14 = vector.broadcast %cst_9 : f32 to vector<8x1xf32>
    %15 = arith.maximumf %13, %14 : vector<8x1xf32>
    %cst_10 = arith.constant 1.000000e+00 : f32
    %16 = vector.broadcast %cst_10 : f32 to vector<8x1xf32>
    %17 = arith.subf %16, %11 : vector<8x1xf32>
    %18 = arith.mulf %17, %9 : vector<8x1xf32>
    %19 = arith.mulf %11, %15 : vector<8x1xf32>
    %20 = arith.mulf %19, %15 : vector<8x1xf32>
    %21 = arith.addf %18, %20 : vector<8x1xf32>
    %cst_11 = arith.constant dense<0.000000e+00> : vector<1xf32>
    %22 = vector.multi_reduction <add>, %21, %cst_11 [0] : vector<8x1xf32> to vector<1xf32>
    %23 = vector.shape_cast %22 : vector<1xf32> to vector<1x1xf32>
    %cst_12 = arith.constant 1.250000e-01 : f32
    %24 = vector.broadcast %cst_12 : f32 to vector<1x1xf32>
    %25 = arith.mulf %23, %24 : vector<1x1xf32>
    %26 = vector.shape_cast %25 : vector<1x1xf32> to vector<1x1xf32>
    %27 = vector.broadcast %26 : vector<1x1xf32> to vector<1x128xf32>
    %c0_13 = arith.constant 0 : index
    %c0_14 = arith.constant 0 : index
    %28 = vector.load %arg4[%c0_13, %c0_14] : memref<1x128xf32, #tpu.memory_space<vmem>>, vector<1x128xf32>
    tpu.vector_store %arg4[%c0_13, %c0_14], %27 {strides = array<i32>} : memref<1x128xf32, #tpu.memory_space<vmem>>, vector<1x128xf32>,
    return
  }
}

</mosaic_0001>

<llo_original>
// kernel: contrastive_loss.1
$region0: #{contrastive_loss.1}
  #allocation0 [shape = 'u32[]', space=smem, size = 0x4, offset = 0x4, fixed_abs, tag = 'smem constant byte address 0x4 - core index']
  #allocation1 [shape = 'u32[144,128]{1,0:T(1,128)}', space=vmem, size = 0x12000, scoped, tag = 'internal scratch']
  %s0 = inlined_call_operand.vmem [shape: f32[8,128], index: 0, kind: input, shape index: {}]
  %s1 = inlined_call_operand.vmem [shape: f32[8,128], index: 1, kind: input, shape index: {}]
  %s2 = inlined_call_operand.vmem [shape: f32[8,1], index: 2, kind: input, shape index: {}]
  %s3 = inlined_call_operand.vmem [shape: f32[8,128], index: 3, kind: input, shape index: {}]
  %s4 = inlined_call_operand.hbm [shape: f32[1,128], index: 4, kind: output, shape index: {}]
  %s5 = sld [smem:[#allocation0]]
  $region26: #{contrastive_loss.1} parent=0
    _
  %s7 = ssub.s32 1, %s5
  %s8 = scalar_select 0, %s7, %s5
  $region1: #{contrastive_loss.1} parent=0
    #allocation2 [shape = 'u8[512]{0}', space=vmem, size = 0x400, scoped, tag = 'output window, operand 0, single buffered']
    #allocation3 [shape = 's32[1]{0}', space=sflag, size = 0x4, scoped, tag = 'scoped memory for contrastive_loss.1']
    %9 = vsyncpa [#allocation3], 0
    // Predicated region
    $region2: #{contrastive_loss.1} parent=1 // pred_check
      _
    $region3: #{contrastive_loss.1} parent=1 // pred_check_branch
      %11 = sbr.rel (0) target = $region5
    $region4: #{contrastive_loss.1} parent=1 // pred_region
      _
    $region5: #{contrastive_loss.1} parent=1 // pred_fallthru
      _
    // Predicated region
    $region6: #{contrastive_loss.1} parent=1 // pred_check
      _
    $region7: #{contrastive_loss.1} parent=1 // pred_check_branch
      %13 = sbr.rel (0) target = $region9
    $region8: #{contrastive_loss.1} parent=1 // pred_region
      _
    $region9: #{contrastive_loss.1} parent=1 // pred_fallthru
      _
    // Predicated region
    $region10: #{contrastive_loss.1} parent=1 // pred_check
      _
    $region11: #{contrastive_loss.1} parent=1 // pred_check_branch
      %15 = sbr.rel (0) target = $region13
    $region12: #{contrastive_loss.1} parent=1 // pred_region
      _
    $region13: #{contrastive_loss.1} parent=1 // pred_fallthru
      _
    // Predicated region
    $region14: #{contrastive_loss.1} parent=1 // pred_check
      _
    $region15: #{contrastive_loss.1} parent=1 // pred_check_branch
      %17 = sbr.rel (0) target = $region17
    $region16: #{contrastive_loss.1} parent=1 // pred_region
      _
    $region17: #{contrastive_loss.1} parent=1 // pred_fallthru
      _
    %v18 = vld [vmem:[%s0] sm:$0xff]
    %v19 = vld [vmem:[%s1] sm:$0xff]
    %v20 = vsub.f32 %v18, %v19
    %v21 = vadd.f32 %v20, 1e-06
    %v22 = vmul.f32 %v21, %v21
    %v23 = vld [vmem:[%s3] sm:$0xff]
    %v24 = vmul.f32 %v22, %v23
    %25 = vadd.xlane.f32.xlu0 %v24
    %v26 = vpop.xlane.xlu0 %25
    %v27 = vrsqrt.pop %v26
    %v28 = vmul.f32 %v26, %v27
    %vm29 = vcmp.eq.f32.partialorder %v26, inf
    %v30 = vsel %vm29, %v26, %v28
    %vm31 = vcmp.eq.f32.partialorder %v26, 0.0
    %v32 = vand.u32 %v26, 2147483648
    %v33 = vsel %vm31, %v32, %v30
    %v34 = vld [vmem:[%s2] sm:$0xff]
    %v35 = vsub.f32 2.0, %v33
    %v36 = vmax.f32 %v35, 0.0
    %v37 = vsub.f32 1.0, %v34
    %v38 = vmul.f32 %v37, %v26
    %v39 = vmul.f32 %v34, %v36
    %v40 = vmul.f32 %v39, %v36
    %v41 = vadd.f32 %v38, %v40
    %vm42 = vcmask 7168
    %v43 = vsel %vm42, %v41, 0.0
    %v44 = vrot.slane %v43, 4
    %v45 = vadd.f32 %v43, %v44
    %v46 = vrot.slane %v45, 2
    %v47 = vadd.f32 %v45, %v46
    %v48 = vrot.slane %v47, 1
    %v49 = vadd.f32 %v47, %v48
    %v50 = vmul.f32 %v49, 0.125
    %52 = vset.pattern.permute.xlu0 0
    %53 = vperm.xlu0 %52, %v50
    %v54 = vpop.permute.xlu0 %53
    %56 = vst [vmem:[#allocation2] sm:$0x1] %v54
    // Predicated region
    $region18: #{contrastive_loss.1} parent=1 // pred_check
      _
    $region19: #{contrastive_loss.1} parent=1 // pred_check_branch
      %58 = sbr.rel (0) target = $region21
    $region20: #{contrastive_loss.1} parent=1 // pred_region
      %s60 = ssub.s32 16, 16
      %61 = vsyncadd [#allocation3], %s60
      %s63 = sshll.u32 [#allocation2], 4
      %s64 = int_to_ptr.vmem [resolvable:$true] %s63
      %66 = dma.vmem_to_hbm [thread:$0]  %s64, 16, %s4, [#allocation3]
    $region21: #{contrastive_loss.1} parent=1 // pred_fallthru
      _
    // Predicated region
    $region22: #{contrastive_loss.1} parent=1 // pred_check
      _
    $region23: #{contrastive_loss.1} parent=1 // pred_check_branch
      %68 = sbr.rel (0) target = $region25
    $region24: #{contrastive_loss.1} parent=1 // pred_region
      %69 = dma.done [#allocation3], 16
    $region25: #{contrastive_loss.1} parent=1 // pred_fallthru
      _
    %70 = vsyncpa [#allocation3], 1

</llo_original>
